<compile_context>
chip_gen: v7x
topology: tpu7x:2x2x1
jax: 0.10.0
libtpu: 0.0.40
codegen_flags: <defaults>
</compile_context>

<pallas_src>
import functools

import jax
import jax.numpy as jnp
from jax.experimental import pallas as pl
from jax.experimental.pallas import tpu as pltpu

_LANES = 128  # vreg lane width


def _round_up(x, m):
    return (x + m - 1) // m * m


def _plan(b, d, *, precise):
    """Pick (tm, tn, dk, b_pad, d_pad, nk, vmem_limit) from a VMEM budget."""
    itemsize = 4 if precise else 2          # feature bytes shipped to the kernel
    b128 = _round_up(max(b, 1), _LANES)

    # TN only needs to amortize the ~0.35 us/step grid overhead.
    tn = min(512, b128)

    # K streaming keeps (tile, dk) feature blocks bounded independent of D.
    dk_cap = 2048
    if d <= dk_cap:
        dk, d_pad, nk = d, d, 1
    else:
        dk = dk_cap
        d_pad = _round_up(d, dk)
        nk = d_pad // dk

    try:
        kind = jax.devices()[0].device_kind.lower()
    except Exception:  # pragma: no cover - defensive
        kind = ""
    is_v7 = ("v7" in kind) or ("tpu7" in kind)
    # Usable budget: v7x has 64 MiB physical VMEM (and 2 TCs streaming columns
    # independently), v5e/v6e have 128 MiB.
    budget = (40 if is_v7 else 72) * 1024 * 1024

    def footprint(tm):
        f = 2 * tm * dk * itemsize            # row feature block (double buffered)
        f += 2 * tn * dk * itemsize           # col feature block (double buffered)
        f += 2 * tm * _LANES * 4              # lane-dense row accumulators
        f += (tm * tn * 4) if nk > 1 else 0   # Gram accumulator scratch
        f += 6 * tm * tn * 4                  # elementwise intermediates (sim/e/mask/...)
        f += 8 * tm * 4 + 2 * tn * 4          # labels + per-row outputs (approx)
        return f

    # Grow TM (row block is resident across the whole column sweep, so HBM
    # traffic scales ~ B/TM).  Keep TM a multiple of TN so b_pad is simple;
    # cap at 4*TN (<=2048) for vreg/intermediate sanity.
    tm = tn
    for cand in (tn, 2 * tn, 4 * tn):
        if cand <= b128 and footprint(cand) <= budget:
            tm = cand

    b_pad = _round_up(b, max(tm, tn))
    cap = (56 if is_v7 else 112) * 1024 * 1024
    vmem_limit = int(min(cap, max(footprint(tm) + (8 << 20), 32 << 20)))
    return tm, tn, dk, b_pad, d_pad, nk, vmem_limit


def _supcon_kernel(feat_r_ref, feat_c_ref, lab_col_ref, lab_row_ref,
                   pos_log_ref, logsum_ref,
                   row_sum_acc, pos_log_acc, *opt_sim,
                   inv_temp, b_true, b_pad, tm, tn, lanes, exact_pos_log):
    i = pl.program_id(0)           # row-tile index  ("parallel")
    j = pl.program_id(1)           # col-tile index  (reduction, "arbitrary")
    k = pl.program_id(2)           # D-slab index    (reduction, "arbitrary")
    last_j = pl.num_programs(1) - 1
    last_k = pl.num_programs(2) - 1

    @pl.when((j == 0) & (k == 0))
    def _init_rows():
        row_sum_acc[...] = jnp.zeros_like(row_sum_acc)
        pos_log_acc[...] = jnp.zeros_like(pos_log_acc)

    # Partial Gram tile for this D slab.  Features arrive pre-normalized
    # (and pre-cast) from the wrapper; MXU with f32 accumulation.
    part = jax.lax.dot_general(
        feat_r_ref[...], feat_c_ref[...],
        (((1,), (1,)), ((), ())),
        preferred_element_type=jnp.float32)                       # (tm, tn)

    if opt_sim:                     # static: K-streaming enabled (nk > 1)
        sim_acc = opt_sim[0]

        @pl.when(k == 0)
        def _():
            sim_acc[...] = part

        @pl.when(k != 0)
        def _():
            sim_acc[...] += part

    def _tile_update(sim_raw):
        sim = sim_raw * inv_temp                                  # (tm, tn)

        lab_r = lab_col_ref[...]                                  # (tm, 1) int32
        lab_c = lab_row_ref[...]                                  # (1, tn) int32
        r_idx = i * tm + jax.lax.broadcasted_iota(jnp.int32, (tm, 1), 0)
        c_idx = j * tn + jax.lax.broadcasted_iota(jnp.int32, (1, tn), 1)
        pos = (lab_r == lab_c) & (r_idx != c_idx)                 # (tm, tn)

        e = jnp.exp(sim)                                          # (tm, tn)
        if b_pad != b_true:   # static: only emitted when the batch was padded
            col_valid = c_idx < b_true                            # reused mask
            pos = pos & col_valid & (r_idx < b_true)
            e = jnp.where(col_valid, e, 0.0)

        # Production path avoids the per-tile log: log(exp(sim)+1e-6) ~= sim.
        plog = jnp.where(pos,
                         jnp.log(e + 1e-6) if exact_pos_log else sim,
                         0.0)

        # Lane-dense accumulation: fold the tn columns into 128-lane groups
        # with plain VALU adds (static, lane-aligned slices); keeps the
        # accumulator stores full-lane and skips per-step XLU reductions.
        rs = row_sum_acc[...]
        pls = pos_log_acc[...]
        for g in range(tn // lanes):
            sl = slice(g * lanes, (g + 1) * lanes)
            rs = rs + e[:, sl]
            pls = pls + plog[:, sl]
        row_sum_acc[...] = rs
        pos_log_acc[...] = pls

    if opt_sim:
        @pl.when(k == last_k)
        def _():
            _tile_update(opt_sim[0][...])
    else:
        _tile_update(part)

    @pl.when((j == last_j) & (k == last_k))
    def _finalize():
        # Single cross-lane reduce per row tile per full sweep.
        row_sum = jnp.sum(row_sum_acc[...], axis=1, keepdims=True)
        logsum_ref[...] = jnp.log(row_sum + 1e-6)
        pos_log_ref[...] = jnp.sum(pos_log_acc[...], axis=1, keepdims=True)


def supcon_loss(features, labels, *, temperature=0.1, precise=False):
    """Pallas TPU implementation of SupConLoss.forward.

    precise=False (default): bf16 normalized features on the MXU and the
      log-free positive term (training path).
    precise=True: all-f32 features + exact log(exp(sim)+1e-6) for validation.
    """
    B, D = features.shape
    tm, tn, dk, b_pad, d_pad, nk, vmem_limit = _plan(B, D, precise=precise)

    # Normalization hoisted out of the kernel: done ONCE here in f32
    # (F.normalize(dim=1): x / max(||x||, 1e-12)), then cast for the MXU.
    x = features.astype(jnp.float32)
    x = x / jnp.maximum(jnp.sqrt(jnp.sum(x * x, axis=1, keepdims=True)), 1e-12)
    feat_dtype = jnp.float32 if precise else jnp.bfloat16
    x = x.astype(feat_dtype)
    if b_pad != B or d_pad != D:
        x = jnp.pad(x, ((0, b_pad - B), (0, d_pad - D)))

    labs = labels.astype(jnp.int32)
    labs_pad = jnp.pad(labs, (0, b_pad - B), constant_values=-1) if b_pad != B else labs
    lab_col = labs_pad.reshape(b_pad, 1)    # row-block labels, column view
    lab_row = labs_pad.reshape(1, b_pad)    # col-block labels, row view

    grid = (b_pad // tm, b_pad // tn, nk)

    scratch = [pltpu.VMEM((tm, _LANES), jnp.float32),    # row-sum of exp (lane-dense)
               pltpu.VMEM((tm, _LANES), jnp.float32)]    # masked positive-log sum
    if nk > 1:
        scratch.append(pltpu.VMEM((tm, tn), jnp.float32))  # Gram accumulator

    kernel = functools.partial(
        _supcon_kernel,
        inv_temp=float(1.0 / temperature),
        b_true=B, b_pad=b_pad, tm=tm, tn=tn, lanes=_LANES,
        exact_pos_log=precise)

    # TODO(synk): consider pipeline_mode=pl.Buffered(3) on the column feature
    # block for very large D once the per-chip VMEM headroom is confirmed.
    pos_log_rows, logsum_rows = pl.pallas_call(
        kernel,
        out_shape=(jax.ShapeDtypeStruct((b_pad, 1), jnp.float32),
                   jax.ShapeDtypeStruct((b_pad, 1), jnp.float32)),
        grid=grid,
        in_specs=[
            pl.BlockSpec((tm, dk), lambda i, j, k: (i, k)),   # row block of features
            pl.BlockSpec((tn, dk), lambda i, j, k: (j, k)),   # col block of features
            pl.BlockSpec((tm, 1), lambda i, j, k: (i, 0)),    # labels (column view)
            pl.BlockSpec((1, tn), lambda i, j, k: (0, j)),    # labels (row view)
        ],
        out_specs=(
            pl.BlockSpec((tm, 1), lambda i, j, k: (i, 0)),    # sum_{pos} "log" term
            pl.BlockSpec((tm, 1), lambda i, j, k: (i, 0)),    # log(rowsum + 1e-6)
        ),
        scratch_shapes=scratch,
        compiler_params=pltpu.CompilerParams(
            dimension_semantics=("parallel", "arbitrary", "arbitrary"),
            vmem_limit_bytes=vmem_limit),
    )(x, x, lab_col, lab_row)

    # Per-row positive counts from labels alone (kernel no longer counts).
    # XLA fuses the broadcast-compare into the reduce; nothing B x B lands in HBM.
    cnt = jnp.sum(labs[:, None] == labs[None, :], axis=1).astype(jnp.float32) - 1.0
    total_pos = jnp.sum(cnt)

    pos_log = pos_log_rows[:B, 0]
    logsum = logsum_rows[:B, 0]
    # NOTE: like the PyTorch reference, zero positive pairs -> NaN (0/0), and
    # exp(sim/T) is intentionally un-stabilized (matches reference; f32
    # overflows only for T < ~0.0114).
    return -(jnp.sum(pos_log) - jnp.sum(cnt * logsum)) / total_pos


def _reference(features, labels, temperature=0.1):
    """Pure-JAX transcription of the PyTorch SupConLoss.forward."""
    x = features.astype(jnp.float32)
    x = x / jnp.maximum(jnp.linalg.norm(x, axis=1, keepdims=True), 1e-12)
    sim = (x @ x.T) / temperature
    b = x.shape[0]
    pos = (labels[None, :] == labels[:, None]) & ~jnp.eye(b, dtype=bool)
    exp_sim = jnp.exp(sim)
    log_prob = (jnp.log(exp_sim * pos.astype(exp_sim.dtype) + 1e-6)
                - jnp.log(jnp.sum(exp_sim, axis=1, keepdims=True) + 1e-6))
    return -jnp.sum(jnp.where(pos, log_prob, 0.0)) / jnp.sum(pos)


if __name__ == "__main__":
    key = jax.random.PRNGKey(0)
    B, D = 8, 32

    k_feat, _ = jax.random.split(key)
    feats = jax.random.normal(k_feat, (B, D), dtype=jnp.float32)
    # 3 classes: label 0 x3, label 1 x3, label 2 x2 -> 14 positive pairs.
    labels = jnp.array([0, 1, 2, 0, 1, 2, 0, 1], dtype=jnp.int32)

    # Production path: bf16 MXU operands, log-free positive term.
    loss_fast = jax.block_until_ready(supcon_loss(feats, labels, temperature=0.1))
    # Exact f32 path for validation against the reference.
    loss_precise = jax.block_until_ready(
        supcon_loss(feats, labels, temperature=0.1, precise=True))

    ref = _reference(feats, labels, temperature=0.1)

    assert jnp.allclose(loss_precise, ref, atol=1e-4, rtol=1e-4), (loss_precise, ref)
    assert jnp.allclose(loss_fast, ref, atol=2e-1, rtol=2e-1), (loss_fast, ref)

    print("KERNEL_OK")
</pallas_src>

<mosaic_0001>
module attributes {stable_mosaic.version = 11 : i64} {
  func.func @_supcon_kernel(%arg0: i32, %arg1: i32, %arg2: i32, %arg3: memref<128x32xbf16, #tpu.memory_space<vmem>>, %arg4: memref<128x32xbf16, #tpu.memory_space<vmem>>, %arg5: memref<128x1xi32, #tpu.memory_space<vmem>>, %arg6: memref<1x128xi32, #tpu.memory_space<vmem>>, %arg7: memref<128x1xf32, #tpu.memory_space<vmem>>, %arg8: memref<128x1xf32, #tpu.memory_space<vmem>>, %arg9: memref<128x128xf32, #tpu.memory_space<vmem>>, %arg10: memref<128x128xf32, #tpu.memory_space<vmem>>) attributes {dimension_semantics = [#tpu.dimension_semantics<parallel>, #tpu.dimension_semantics<arbitrary>, #tpu.dimension_semantics<arbitrary>], iteration_bounds = array<i64: 1, 1, 1>, scalar_prefetch = 0 : i64, scratch_operands = 2 : i64, tpu.core_type = #tpu.core_type<tc>, window_params = [{transform_indices = @transform_0, window_bounds = array<i64: 128, 32>}, {transform_indices = @transform_1, window_bounds = array<i64: 128, 32>}, {transform_indices = @transform_2, window_bounds = array<i64: 128, 1>}, {transform_indices = @transform_3, window_bounds = array<i64: 1, 128>}, {transform_indices = @transform_4, window_bounds = array<i64: 128, 1>}, {transform_indices = @transform_5, window_bounds = array<i64: 128, 1>}]} {
    %c0_i32 = arith.constant 0 : i32
    %0 = arith.cmpi eq, %arg1, %c0_i32 : i32
    %c0_i32_0 = arith.constant 0 : i32
    %1 = arith.cmpi eq, %arg2, %c0_i32_0 : i32
    %2 = arith.andi %0, %1 : i1
    %3 = arith.extui %2 : i1 to i32
    %c0_i32_1 = arith.constant 0 : i32
    %4 = arith.cmpi ne, %3, %c0_i32_1 : i32
    scf.if %4 {
      %cst_25 = arith.constant 0.000000e+00 : f32
      %53 = vector.broadcast %cst_25 : f32 to vector<128x128xf32>
      %c0_26 = arith.constant 0 : index
      %c0_27 = arith.constant 0 : index
      %54 = vector.load %arg9[%c0_26, %c0_27] : memref<128x128xf32, #tpu.memory_space<vmem>>, vector<128x128xf32>
      tpu.vector_store %arg9[%c0_26, %c0_27], %53 {strides = array<i32>} : memref<128x128xf32, #tpu.memory_space<vmem>>, vector<128x128xf32>,
      %cst_28 = arith.constant 0.000000e+00 : f32
      %55 = vector.broadcast %cst_28 : f32 to vector<128x128xf32>
      %c0_29 = arith.constant 0 : index
      %c0_30 = arith.constant 0 : index
      %56 = vector.load %arg10[%c0_29, %c0_30] : memref<128x128xf32, #tpu.memory_space<vmem>>, vector<128x128xf32>
      tpu.vector_store %arg10[%c0_29, %c0_30], %55 {strides = array<i32>} : memref<128x128xf32, #tpu.memory_space<vmem>>, vector<128x128xf32>,
    } else {
    }
    %c0 = arith.constant 0 : index
    %c0_2 = arith.constant 0 : index
    %5 = vector.load %arg3[%c0, %c0_2] : memref<128x32xbf16, #tpu.memory_space<vmem>>, vector<128x32xbf16>
    %c0_3 = arith.constant 0 : index
    %c0_4 = arith.constant 0 : index
    %6 = vector.load %arg4[%c0_3, %c0_4] : memref<128x32xbf16, #tpu.memory_space<vmem>>, vector<128x32xbf16>
    %cst = arith.constant dense<0.000000e+00> : vector<128x128xf32>
    %7 = tpu.matmul %5, %6, %cst {dimension_numbers = #tpu.dot_dimension_numbers<[1], [1], [0], [0], [0, 0, 1, 0], [], []>} : vector<128x32xbf16>, vector<128x32xbf16>, vector<128x128xf32> -> vector<128x128xf32>
    %cst_5 = arith.constant 1.000000e+01 : f32
    %8 = vector.broadcast %cst_5 : f32 to vector<128x128xf32>
    %9 = arith.mulf %7, %8 : vector<128x128xf32>
    %c0_6 = arith.constant 0 : index
    %c0_7 = arith.constant 0 : index
    %10 = vector.load %arg5[%c0_6, %c0_7] : memref<128x1xi32, #tpu.memory_space<vmem>>, vector<128x1xi32>
    %c0_8 = arith.constant 0 : index
    %c0_9 = arith.constant 0 : index
    %11 = vector.load %arg6[%c0_8, %c0_9] : memref<1x128xi32, #tpu.memory_space<vmem>>, vector<1x128xi32>
    %c128_i32 = arith.constant 128 : i32
    %12 = arith.muli %arg0, %c128_i32 : i32
    %13 = tpu.iota {dimensions = array<i32: 0>} : vector<128x1xi32>
    %14 = vector.broadcast %12 : i32 to vector<128x1xi32>
    %15 = arith.addi %14, %13 : vector<128x1xi32>
    %c128_i32_10 = arith.constant 128 : i32
    %16 = arith.muli %arg1, %c128_i32_10 : i32
    %17 = tpu.iota {dimensions = array<i32: 1>} : vector<1x128xi32>
    %18 = vector.broadcast %16 : i32 to vector<1x128xi32>
    %19 = arith.addi %18, %17 : vector<1x128xi32>
    %20 = vector.broadcast %10 : vector<128x1xi32> to vector<128x128xi32>
    %21 = vector.broadcast %11 : vector<1x128xi32> to vector<128x128xi32>
    %22 = arith.cmpi eq, %20, %21 : vector<128x128xi32>
    %23 = vector.broadcast %15 : vector<128x1xi32> to vector<128x128xi32>
    %24 = vector.broadcast %19 : vector<1x128xi32> to vector<128x128xi32>
    %25 = arith.cmpi ne, %23, %24 : vector<128x128xi32>
    %26 = arith.andi %22, %25 : vector<128x128xi1>
    %27 = math.exp %9 : vector<128x128xf32>
    %c8_i32 = arith.constant 8 : i32
    %28 = vector.broadcast %c8_i32 : i32 to vector<1x128xi32>
    %29 = arith.cmpi slt, %19, %28 : vector<1x128xi32>
    %30 = vector.broadcast %29 : vector<1x128xi1> to vector<128x128xi1>
    %31 = arith.andi %26, %30 : vector<128x128xi1>
    %c8_i32_11 = arith.constant 8 : i32
    %32 = vector.broadcast %c8_i32_11 : i32 to vector<128x1xi32>
    %33 = arith.cmpi slt, %15, %32 : vector<128x1xi32>
    %34 = vector.broadcast %33 : vector<128x1xi1> to vector<128x128xi1>
    %35 = arith.andi %31, %34 : vector<128x128xi1>
    %cst_12 = arith.constant 0.000000e+00 : f32
    %36 = vector.shape_cast %29 : vector<1x128xi1> to vector<1x128xi1>
    %37 = vector.broadcast %36 : vector<1x128xi1> to vector<128x128xi1>
    %38 = vector.broadcast %cst_12 : f32 to vector<128x128xf32>
    %39 = arith.select %37, %27, %38 : vector<128x128xi1>, vector<128x128xf32>
    %cst_13 = arith.constant 0.000000e+00 : f32
    %40 = vector.broadcast %cst_13 : f32 to vector<128x128xf32>
    %41 = arith.select %35, %9, %40 : vector<128x128xi1>, vector<128x128xf32>
    %c0_14 = arith.constant 0 : index
    %c0_15 = arith.constant 0 : index
    %42 = vector.load %arg9[%c0_14, %c0_15] : memref<128x128xf32, #tpu.memory_space<vmem>>, vector<128x128xf32>
    %c0_16 = arith.constant 0 : index
    %c0_17 = arith.constant 0 : index
    %43 = vector.load %arg10[%c0_16, %c0_17] : memref<128x128xf32, #tpu.memory_space<vmem>>, vector<128x128xf32>
    %44 = arith.addf %42, %39 : vector<128x128xf32>
    %45 = arith.addf %43, %41 : vector<128x128xf32>
    %c0_18 = arith.constant 0 : index
    %c0_19 = arith.constant 0 : index
    %46 = vector.load %arg9[%c0_18, %c0_19] : memref<128x128xf32, #tpu.memory_space<vmem>>, vector<128x128xf32>
    tpu.vector_store %arg9[%c0_18, %c0_19], %44 {strides = array<i32>} : memref<128x128xf32, #tpu.memory_space<vmem>>, vector<128x128xf32>,
    %c0_20 = arith.constant 0 : index
    %c0_21 = arith.constant 0 : index
    %47 = vector.load %arg10[%c0_20, %c0_21] : memref<128x128xf32, #tpu.memory_space<vmem>>, vector<128x128xf32>
    tpu.vector_store %arg10[%c0_20, %c0_21], %45 {strides = array<i32>} : memref<128x128xf32, #tpu.memory_space<vmem>>, vector<128x128xf32>,
    %c0_i32_22 = arith.constant 0 : i32
    %48 = arith.cmpi eq, %arg1, %c0_i32_22 : i32
    %c0_i32_23 = arith.constant 0 : i32
    %49 = arith.cmpi eq, %arg2, %c0_i32_23 : i32
    %50 = arith.andi %48, %49 : i1
    %51 = arith.extui %50 : i1 to i32
    %c0_i32_24 = arith.constant 0 : i32
    %52 = arith.cmpi ne, %51, %c0_i32_24 : i32
    scf.if %52 {
      %c0_25 = arith.constant 0 : index
      %c0_26 = arith.constant 0 : index
      %53 = vector.load %arg9[%c0_25, %c0_26] : memref<128x128xf32, #tpu.memory_space<vmem>>, vector<128x128xf32>
      %cst_27 = arith.constant dense<0.000000e+00> : vector<128xf32>
      %54 = vector.multi_reduction <add>, %53, %cst_27 [1] : vector<128x128xf32> to vector<128xf32>
      %55 = vector.shape_cast %54 : vector<128xf32> to vector<128x1xf32>
      %cst_28 = arith.constant 9.99999997E-7 : f32
      %56 = vector.broadcast %cst_28 : f32 to vector<128x1xf32>
      %57 = arith.addf %55, %56 : vector<128x1xf32>
      %58 = math.log %57 : vector<128x1xf32>
      %c0_29 = arith.constant 0 : index
      %c0_30 = arith.constant 0 : index
      %59 = vector.load %arg8[%c0_29, %c0_30] : memref<128x1xf32, #tpu.memory_space<vmem>>, vector<128x1xf32>
      tpu.vector_store %arg8[%c0_29, %c0_30], %58 {strides = array<i32>} : memref<128x1xf32, #tpu.memory_space<vmem>>, vector<128x1xf32>,
      %c0_31 = arith.constant 0 : index
      %c0_32 = arith.constant 0 : index
      %60 = vector.load %arg10[%c0_31, %c0_32] : memref<128x128xf32, #tpu.memory_space<vmem>>, vector<128x128xf32>
      %cst_33 = arith.constant dense<0.000000e+00> : vector<128xf32>
      %61 = vector.multi_reduction <add>, %60, %cst_33 [1] : vector<128x128xf32> to vector<128xf32>
      %62 = vector.shape_cast %61 : vector<128xf32> to vector<128x1xf32>
      %c0_34 = arith.constant 0 : index
      %c0_35 = arith.constant 0 : index
      %63 = vector.load %arg7[%c0_34, %c0_35] : memref<128x1xf32, #tpu.memory_space<vmem>>, vector<128x1xf32>
      tpu.vector_store %arg7[%c0_34, %c0_35], %62 {strides = array<i32>} : memref<128x1xf32, #tpu.memory_space<vmem>>, vector<128x1xf32>,
    } else {
    }
    return
  }
  func.func @transform_0(%arg0: i32, %arg1: i32, %arg2: i32) -> (i32, i32) {
    %c0_i32 = arith.constant 0 : i32
    return %arg0, %arg2 : i32, i32
  }
  func.func @transform_1(%arg0: i32, %arg1: i32, %arg2: i32) -> (i32, i32) {
    %c0_i32 = arith.constant 0 : i32
    return %arg1, %arg2 : i32, i32
  }
  func.func @transform_2(%arg0: i32, %arg1: i32, %arg2: i32) -> (i32, i32) {
    %c0_i32 = arith.constant 0 : i32
    %c0_i32_0 = arith.constant 0 : i32
    return %arg0, %c0_i32 : i32, i32
  }
  func.func @transform_3(%arg0: i32, %arg1: i32, %arg2: i32) -> (i32, i32) {
    %c0_i32 = arith.constant 0 : i32
    %c0_i32_0 = arith.constant 0 : i32
    return %c0_i32, %arg1 : i32, i32
  }
  func.func @transform_4(%arg0: i32, %arg1: i32, %arg2: i32) -> (i32, i32) {
    %c0_i32 = arith.constant 0 : i32
    %c0_i32_0 = arith.constant 0 : i32
    return %arg0, %c0_i32 : i32, i32
  }
  func.func @transform_5(%arg0: i32, %arg1: i32, %arg2: i32) -> (i32, i32) {
    %c0_i32 = arith.constant 0 : i32
    %c0_i32_0 = arith.constant 0 : i32
    return %arg0, %c0_i32 : i32, i32
  }
}

</mosaic_0001>

<llo_original>
// kernel: tpu_custom_call.1
$region0: #{tpu_custom_call.1}
  #allocation0 [shape = 'u32[]', space=smem, size = 0x4, offset = 0x4, fixed_abs, tag = 'smem constant byte address 0x4 - core index']
  #allocation1 [shape = 'u32[144,128]{1,0:T(1,128)}', space=vmem, size = 0x12000, scoped, tag = 'internal scratch']
  #allocation2 [shape = 'f32[128,128]{1,0:T(8,128)}', space=vmem, size = 0x10000, scoped, tag = 'scratch operand']
  #allocation3 [shape = 'f32[128,128]{1,0:T(8,128)}', space=vmem, size = 0x10000, scoped, tag = 'scratch operand']
  %s0 = inlined_call_operand.vmem [shape: bf16[128,32], index: 0, kind: input, shape index: {}]
  %s1 = inlined_call_operand.vmem [shape: bf16[128,32], index: 1, kind: input, shape index: {}]
  %s2 = inlined_call_operand.vmem [shape: s32[128,1], index: 2, kind: input, shape index: {}]
  %s3 = inlined_call_operand.vmem [shape: s32[1,128], index: 3, kind: input, shape index: {}]
  %s4 = inlined_call_operand.vmem [shape: f32[128,1], index: 4, kind: output, shape index: {0}]
  %s5 = inlined_call_operand.vmem [shape: f32[128,1], index: 5, kind: output, shape index: {1}]
  %6 = xla_tuple %s4, %s5
  %s7 = sld [smem:[#allocation0]]
  $region42: #{tpu_custom_call.1} parent=0
    _
  %s9 = ssub.s32 1, %s7
  %s10 = scalar_select 0, %s9, %s7
  // Predicated region
  $region2: #{tpu_custom_call.1} parent=0 // pred_check
    _
  $region3: #{tpu_custom_call.1} parent=0 // pred_check_branch
    %12 = sbr.rel (0) target = $region5
  $region4: #{tpu_custom_call.1} parent=0 // pred_region
    _
  $region5: #{tpu_custom_call.1} parent=0 // pred_fallthru
    _
  // Predicated region
  $region6: #{tpu_custom_call.1} parent=0 // pred_check
    _
  $region7: #{tpu_custom_call.1} parent=0 // pred_check_branch
    %14 = sbr.rel (0) target = $region9
  $region8: #{tpu_custom_call.1} parent=0 // pred_region
    _
  $region9: #{tpu_custom_call.1} parent=0 // pred_fallthru
    _
  // Predicated region
  $region10: #{tpu_custom_call.1} parent=0 // pred_check
    _
  $region11: #{tpu_custom_call.1} parent=0 // pred_check_branch
    %16 = sbr.rel (0) target = $region13
  $region12: #{tpu_custom_call.1} parent=0 // pred_region
    _
  $region13: #{tpu_custom_call.1} parent=0 // pred_fallthru
    _
  // Predicated region
  $region14: #{tpu_custom_call.1} parent=0 // pred_check
    _
  $region15: #{tpu_custom_call.1} parent=0 // pred_check_branch
    %18 = sbr.rel (0) target = $region17
  $region16: #{tpu_custom_call.1} parent=0 // pred_region
    _
  $region17: #{tpu_custom_call.1} parent=0 // pred_fallthru
    _
  %p20 = scmp.eq.s32.totalorder 0, 0
  %p21 = scmp.eq.s32.totalorder 0, 0
  %p22 = pnand %p20, %p21
  %p23 = pneg %p22
  // Predicated region
  $region18: #{tpu_custom_call.1} parent=0 // pred_check
    _
  $region19: #{tpu_custom_call.1} parent=0 // pred_check_branch
    %25 = sbr.rel (%p22) target = $region21
  $region20: #{tpu_custom_call.1} parent=0 // pred_region
    %26 = vst [vmem:[#allocation2] sm:$0xff] 0.0
    %27 = vst [vmem:[#allocation2 + $0x8] sm:$0xff] 0.0
    %28 = vst [vmem:[#allocation2 + $0x10] sm:$0xff] 0.0
    %29 = vst [vmem:[#allocation2 + $0x18] sm:$0xff] 0.0
    %30 = vst [vmem:[#allocation2 + $0x20] sm:$0xff] 0.0
    %31 = vst [vmem:[#allocation2 + $0x28] sm:$0xff] 0.0
    %32 = vst [vmem:[#allocation2 + $0x30] sm:$0xff] 0.0
    %33 = vst [vmem:[#allocation2 + $0x38] sm:$0xff] 0.0
    %34 = vst [vmem:[#allocation2 + $0x40] sm:$0xff] 0.0
    %35 = vst [vmem:[#allocation2 + $0x48] sm:$0xff] 0.0
    %36 = vst [vmem:[#allocation2 + $0x50] sm:$0xff] 0.0
    %37 = vst [vmem:[#allocation2 + $0x58] sm:$0xff] 0.0
    %38 = vst [vmem:[#allocation2 + $0x60] sm:$0xff] 0.0
    %39 = vst [vmem:[#allocation2 + $0x68] sm:$0xff] 0.0
    %40 = vst [vmem:[#allocation2 + $0x70] sm:$0xff] 0.0
    %41 = vst [vmem:[#allocation2 + $0x78] sm:$0xff] 0.0
    %42 = vst [vmem:[#allocation3] sm:$0xff] 0.0
    %43 = vst [vmem:[#allocation3 + $0x8] sm:$0xff] 0.0
    %44 = vst [vmem:[#allocation3 + $0x10] sm:$0xff] 0.0
    %45 = vst [vmem:[#allocation3 + $0x18] sm:$0xff] 0.0
    %46 = vst [vmem:[#allocation3 + $0x20] sm:$0xff] 0.0
    %47 = vst [vmem:[#allocation3 + $0x28] sm:$0xff] 0.0
    %48 = vst [vmem:[#allocation3 + $0x30] sm:$0xff] 0.0
    %49 = vst [vmem:[#allocation3 + $0x38] sm:$0xff] 0.0
    %50 = vst [vmem:[#allocation3 + $0x40] sm:$0xff] 0.0
    %51 = vst [vmem:[#allocation3 + $0x48] sm:$0xff] 0.0
    %52 = vst [vmem:[#allocation3 + $0x50] sm:$0xff] 0.0
    %53 = vst [vmem:[#allocation3 + $0x58] sm:$0xff] 0.0
    %54 = vst [vmem:[#allocation3 + $0x60] sm:$0xff] 0.0
    %55 = vst [vmem:[#allocation3 + $0x68] sm:$0xff] 0.0
    %56 = vst [vmem:[#allocation3 + $0x70] sm:$0xff] 0.0
    %57 = vst [vmem:[#allocation3 + $0x78] sm:$0xff] 0.0
  $region21: #{tpu_custom_call.1} parent=0 // pred_fallthru
    _
  %v58 = vld [vmem:[%s0] sm:$0xf]
  %v59 = vld [vmem:[%s0 + $0x4] sm:$0xf]
  %v60 = vld [vmem:[%s0 + $0x8] sm:$0xf]
  %v61 = vld [vmem:[%s0 + $0xc] sm:$0xf]
  %v62 = vld [vmem:[%s0 + $0x10] sm:$0xf]
  %v63 = vld [vmem:[%s0 + $0x14] sm:$0xf]
  %v64 = vld [vmem:[%s0 + $0x18] sm:$0xf]
  %v65 = vld [vmem:[%s0 + $0x1c] sm:$0xf]
  %v66 = vld [vmem:[%s0 + $0x20] sm:$0xf]
  %v67 = vld [vmem:[%s0 + $0x24] sm:$0xf]
  %v68 = vld [vmem:[%s0 + $0x28] sm:$0xf]
  %v69 = vld [vmem:[%s0 + $0x2c] sm:$0xf]
  %v70 = vld [vmem:[%s0 + $0x30] sm:$0xf]
  %v71 = vld [vmem:[%s0 + $0x34] sm:$0xf]
  %v72 = vld [vmem:[%s0 + $0x38] sm:$0xf]
  %v73 = vld [vmem:[%s0 + $0x3c] sm:$0xf]
  %v74 = vld [vmem:[%s1] sm:$0xf]
  %v75 = vld [vmem:[%s1 + $0x4] sm:$0xf]
  %v76 = vld [vmem:[%s1 + $0x8] sm:$0xf]
  %v77 = vld [vmem:[%s1 + $0xc] sm:$0xf]
  %v78 = vld [vmem:[%s1 + $0x10] sm:$0xf]
  %v79 = vld [vmem:[%s1 + $0x14] sm:$0xf]
  %v80 = vld [vmem:[%s1 + $0x18] sm:$0xf]
  %v81 = vld [vmem:[%s1 + $0x1c] sm:$0xf]
  %v82 = vld [vmem:[%s1 + $0x20] sm:$0xf]
  %v83 = vld [vmem:[%s1 + $0x24] sm:$0xf]
  %v84 = vld [vmem:[%s1 + $0x28] sm:$0xf]
  %v85 = vld [vmem:[%s1 + $0x2c] sm:$0xf]
  %v86 = vld [vmem:[%s1 + $0x30] sm:$0xf]
  %v87 = vld [vmem:[%s1 + $0x34] sm:$0xf]
  %v88 = vld [vmem:[%s1 + $0x38] sm:$0xf]
  %v89 = vld [vmem:[%s1 + $0x3c] sm:$0xf]
  %v106 = vunpack.c.l.b16 %v58
  %v107 = vunpack.c.l.b16 %v59
  %v108 = vunpack.c.l.b16 %v60
  %v109 = vunpack.c.l.b16 %v61
  %v110 = vunpack.c.l.b16 %v62
  %v111 = vunpack.c.l.b16 %v63
  %v112 = vunpack.c.l.b16 %v64
  %v113 = vunpack.c.l.b16 %v65
  %v114 = vunpack.c.l.b16 %v66
  %v115 = vunpack.c.l.b16 %v67
  %v116 = vunpack.c.l.b16 %v68
  %v117 = vunpack.c.l.b16 %v69
  %v118 = vunpack.c.l.b16 %v70
  %v119 = vunpack.c.l.b16 %v71
  %v120 = vunpack.c.l.b16 %v72
  %v121 = vunpack.c.l.b16 %v73
  %v122 = vpack.c.b16 %v107, %v106
  %v123 = vpack.c.b16 %v109, %v108
  %v124 = vpack.c.b16 %v111, %v110
  %v125 = vpack.c.b16 %v113, %v112
  %v126 = vpack.c.b16 %v115, %v114
  %v127 = vpack.c.b16 %v117, %v116
  %v128 = vpack.c.b16 %v119, %v118
  %v129 = vpack.c.b16 %v121, %v120
  %v146 = vunpack.c.l.b16 %v74
  %v147 = vunpack.c.l.b16 %v75
  %v148 = vunpack.c.l.b16 %v76
  %v149 = vunpack.c.l.b16 %v77
  %v150 = vunpack.c.l.b16 %v78
  %v151 = vunpack.c.l.b16 %v79
  %v152 = vunpack.c.l.b16 %v80
  %v153 = vunpack.c.l.b16 %v81
  %v154 = vunpack.c.l.b16 %v82
  %v155 = vunpack.c.l.b16 %v83
  %v156 = vunpack.c.l.b16 %v84
  %v157 = vunpack.c.l.b16 %v85
  %v158 = vunpack.c.l.b16 %v86
  %v159 = vunpack.c.l.b16 %v87
  %v160 = vunpack.c.l.b16 %v88
  %v161 = vunpack.c.l.b16 %v89
  %v162 = vpack.c.b16 %v147, %v146
  %v163 = vpack.c.b16 %v149, %v148
  %v164 = vpack.c.b16 %v151, %v150
  %v165 = vpack.c.b16 %v153, %v152
  %v166 = vpack.c.b16 %v155, %v154
  %v167 = vpack.c.b16 %v157, %v156
  %v168 = vpack.c.b16 %v159, %v158
  %v169 = vpack.c.b16 %v161, %v160
  %vm170 = vcmask 261120
  %v172 = vsel %vm170, %v122, 0
  %v175 = vsel %vm170, %v123, 0
  %v178 = vsel %vm170, %v124, 0
  %v181 = vsel %vm170, %v125, 0
  %v184 = vsel %vm170, %v126, 0
  %v187 = vsel %vm170, %v127, 0
  %v190 = vsel %vm170, %v128, 0
  %v193 = vsel %vm170, %v129, 0
  %v196 = vsel %vm170, %v162, 0
  %v199 = vsel %vm170, %v163, 0
  %v202 = vsel %vm170, %v164, 0
  %v205 = vsel %vm170, %v165, 0
  %v208 = vsel %vm170, %v166, 0
  %v211 = vsel %vm170, %v167, 0
  %v214 = vsel %vm170, %v168, 0
  %v217 = vsel %vm170, %v169, 0
  %219 = vmatprep.subr.bf16.mxu0 0
  %220 = vmatpush1.bf16.xpose.msra.mxu0 %v196
  %221 = vmatprep.subr.bf16.mxu0 0
  %222 = vmatpush1.bf16.xpose.msra.mxu0 %v199
  %223 = vmatprep.subr.bf16.mxu0 0
  %224 = vmatpush1.bf16.xpose.msra.mxu0 %v202
  %225 = vmatprep.subr.bf16.mxu0 0
  %226 = vmatpush1.bf16.xpose.msra.mxu0 %v205
  %227 = vmatprep.subr.bf16.mxu0 0
  %228 = vmatpush1.bf16.xpose.msra.mxu0 %v208
  %229 = vmatprep.subr.bf16.mxu0 0
  %230 = vmatpush1.bf16.xpose.msra.mxu0 %v211
  %231 = vmatprep.subr.bf16.mxu0 0
  %232 = vmatpush1.bf16.xpose.msra.mxu0 %v214
  %233 = vmatprep.subr.bf16.mxu0 0
  %234 = vmatpush1.bf16.xpose.msra.mxu0 %v217
  %235 = vmatprep.subr.bf16.mxu0 0
  %236 = vmatpush1.bf16.xpose.msra.mxu0 0
  %237 = vmatprep.subr.bf16.mxu0 0
  %238 = vmatpush1.bf16.xpose.msra.mxu0 0
  %239 = vmatprep.subr.bf16.mxu0 0
  %240 = vmatpush1.bf16.xpose.msra.mxu0 0
  %241 = vmatprep.subr.bf16.mxu0 0
  %242 = vmatpush1.bf16.xpose.msra.mxu0 0
  %243 = vmatprep.subr.bf16.mxu0 0
  %244 = vmatpush1.bf16.xpose.msra.mxu0 0
  %245 = vmatprep.subr.bf16.mxu0 0
  %246 = vmatpush1.bf16.xpose.msra.mxu0 0
  %247 = vmatprep.subr.bf16.mxu0 0
  %248 = vmatpush1.bf16.xpose.msra.mxu0 0
  %249 = vmatprep.subr.bf16.mxu0 0
  %250 = vmatpush1.bf16.xpose.msra.mxu0 0
  %251 = vmatprep.mubr.bf16.mxu0 0
  %252 = vmatmul.mubr.bf16.gmra.mrb[0].mxu0 %v172
  %v253 = vpop.f32.mrb[0].mxu0
  %v254 = vadd.f32 0.0, %v253
  %v255 = vpop.f32.mrb[0].mxu0
  %v256 = vpop.f32.mrb[0].mxu0
  %v257 = vadd.f32 0.0, %v256
  %v258 = vpop.f32.mrb[0].mxu0
  %259 = vmatprep.mubr.bf16.mxu0 0
  %260 = vmatmul.mubr.bf16.gmra.mrb[0].mxu0 %v175
  %v261 = vpop.f32.mrb[0].mxu0
  %v262 = vadd.f32 0.0, %v261
  %v263 = vpop.f32.mrb[0].mxu0
  %v264 = vpop.f32.mrb[0].mxu0
  %v265 = vadd.f32 0.0, %v264
  %v266 = vpop.f32.mrb[0].mxu0
  %267 = vmatprep.mubr.bf16.mxu0 0
  %268 = vmatmul.mubr.bf16.gmra.mrb[0].mxu0 %v178
  %v269 = vpop.f32.mrb[0].mxu0
  %v270 = vadd.f32 0.0, %v269
  %v271 = vpop.f32.mrb[0].mxu0
  %v272 = vpop.f32.mrb[0].mxu0
  %v273 = vadd.f32 0.0, %v272
  %v274 = vpop.f32.mrb[0].mxu0
  %275 = vmatprep.mubr.bf16.mxu0 0
  %276 = vmatmul.mubr.bf16.gmra.mrb[0].mxu0 %v181
  %v277 = vpop.f32.mrb[0].mxu0
  %v278 = vadd.f32 0.0, %v277
  %v279 = vpop.f32.mrb[0].mxu0
  %v280 = vpop.f32.mrb[0].mxu0
  %v281 = vadd.f32 0.0, %v280
  %v282 = vpop.f32.mrb[0].mxu0
  %283 = vmatprep.mubr.bf16.mxu0 0
  %284 = vmatmul.mubr.bf16.gmra.mrb[0].mxu0 %v184
  %v285 = vpop.f32.mrb[0].mxu0
  %v286 = vadd.f32 0.0, %v285
  %v287 = vpop.f32.mrb[0].mxu0
  %v288 = vpop.f32.mrb[0].mxu0
  %v289 = vadd.f32 0.0, %v288
  %v290 = vpop.f32.mrb[0].mxu0
  %291 = vmatprep.mubr.bf16.mxu0 0
  %292 = vmatmul.mubr.bf16.gmra.mrb[0].mxu0 %v187
  %v293 = vpop.f32.mrb[0].mxu0
  %v294 = vadd.f32 0.0, %v293
  %v295 = vpop.f32.mrb[0].mxu0
  %v296 = vpop.f32.mrb[0].mxu0
  %v297 = vadd.f32 0.0, %v296
  %v298 = vpop.f32.mrb[0].mxu0
  %299 = vmatprep.mubr.bf16.mxu0 0
  %300 = vmatmul.mubr.bf16.gmra.mrb[0].mxu0 %v190
  %v301 = vpop.f32.mrb[0].mxu0
  %v302 = vadd.f32 0.0, %v301
  %v303 = vpop.f32.mrb[0].mxu0
  %v304 = vpop.f32.mrb[0].mxu0
  %v305 = vadd.f32 0.0, %v304
  %v306 = vpop.f32.mrb[0].mxu0
  %307 = vmatprep.mubr.bf16.mxu0 0
  %308 = vmatmul.mubr.bf16.gmra.mrb[0].mxu0 %v193
  %v309 = vpop.f32.mrb[0].mxu0
  %v310 = vadd.f32 0.0, %v309
  %v311 = vpop.f32.mrb[0].mxu0
  %v312 = vpop.f32.mrb[0].mxu0
  %v313 = vadd.f32 0.0, %v312
  %v314 = vpop.f32.mrb[0].mxu0
  %315 = vdwg.mxu0
  %v316 = vmul.f32 %v254, 10.0
  %v317 = vmul.f32 %v257, 10.0
  %v318 = vmul.f32 %v262, 10.0
  %v319 = vmul.f32 %v265, 10.0
  %v320 = vmul.f32 %v270, 10.0
  %v321 = vmul.f32 %v273, 10.0
  %v322 = vmul.f32 %v278, 10.0
  %v323 = vmul.f32 %v281, 10.0
  %v324 = vmul.f32 %v286, 10.0
  %v325 = vmul.f32 %v289, 10.0
  %v326 = vmul.f32 %v294, 10.0
  %v327 = vmul.f32 %v297, 10.0
  %v328 = vmul.f32 %v302, 10.0
  %v329 = vmul.f32 %v305, 10.0
  %v330 = vmul.f32 %v310, 10.0
  %v331 = vmul.f32 %v313, 10.0
  %v332 = vld [vmem:[%s2] sm:$0xff]
  %v333 = vld [vmem:[%s2 + $0x8] sm:$0xff]
  %v334 = vld [vmem:[%s2 + $0x10] sm:$0xff]
  %v335 = vld [vmem:[%s2 + $0x18] sm:$0xff]
  %v336 = vld [vmem:[%s2 + $0x20] sm:$0xff]
  %v337 = vld [vmem:[%s2 + $0x28] sm:$0xff]
  %v338 = vld [vmem:[%s2 + $0x30] sm:$0xff]
  %v339 = vld [vmem:[%s2 + $0x38] sm:$0xff]
  %v340 = vld [vmem:[%s2 + $0x40] sm:$0xff]
  %v341 = vld [vmem:[%s2 + $0x48] sm:$0xff]
  %v342 = vld [vmem:[%s2 + $0x50] sm:$0xff]
  %v343 = vld [vmem:[%s2 + $0x58] sm:$0xff]
  %v344 = vld [vmem:[%s2 + $0x60] sm:$0xff]
  %v345 = vld [vmem:[%s2 + $0x68] sm:$0xff]
  %v346 = vld [vmem:[%s2 + $0x70] sm:$0xff]
  %v347 = vld [vmem:[%s2 + $0x78] sm:$0xff]
  %v348 = vld [vmem:[%s3] sm:$0x1]
  %s349 = smul.u32 0, 128
  %v350 = vlaneseq
  %v351 = vshrl.u32 %v350, 7
  %v352 = vadd.s32 %v351, 8
  %v353 = vadd.s32 %v351, 16
  %v354 = vadd.s32 %v351, 24
  %v355 = vadd.s32 %v351, 32
  %v356 = vadd.s32 %v351, 40
  %v357 = vadd.s32 %v351, 48
  %v358 = vadd.s32 %v351, 56
  %v359 = vadd.s32 %v351, 64
  %v360 = vadd.s32 %v351, 72
  %v361 = vadd.s32 %v351, 80
  %v362 = vadd.s32 %v351, 88
  %v363 = vadd.s32 %v351, 96
  %v364 = vadd.s32 %v351, 104
  %v365 = vadd.s32 %v351, 112
  %v366 = vadd.s32 %v351, 120
  %v367 = vstv %s349
  %v368 = vadd.s32 %v367, %v351
  %v369 = vadd.s32 %v367, %v352
  %v370 = vadd.s32 %v367, %v353
  %v371 = vadd.s32 %v367, %v354
  %v372 = vadd.s32 %v367, %v355
  %v373 = vadd.s32 %v367, %v356
  %v374 = vadd.s32 %v367, %v357
  %v375 = vadd.s32 %v367, %v358
  %v376 = vadd.s32 %v367, %v359
  %v377 = vadd.s32 %v367, %v360
  %v378 = vadd.s32 %v367, %v361
  %v379 = vadd.s32 %v367, %v362
  %v380 = vadd.s32 %v367, %v363
  %v381 = vadd.s32 %v367, %v364
  %v382 = vadd.s32 %v367, %v365
  %v383 = vadd.s32 %v367, %v366
  %s384 = smul.u32 0, 128
  %v385 = vlaneseq
  %v386 = vand.u32 %v385, 127
  %v387 = vstv %s384
  %v388 = vadd.s32 %v387, %v386
  %389 = vset.pattern.permute.xlu0 0
  %390 = vperm.xlu0 %389, %v332
  %v391 = vpop.permute.xlu0 %390
  %392 = vset.pattern.permute.xlu0 0
  %393 = vperm.xlu0 %392, %v333
  %v394 = vpop.permute.xlu0 %393
  %395 = vset.pattern.permute.xlu0 0
  %396 = vperm.xlu0 %395, %v334
  %v397 = vpop.permute.xlu0 %396
  %398 = vset.pattern.permute.xlu0 0
  %399 = vperm.xlu0 %398, %v335
  %v400 = vpop.permute.xlu0 %399
  %401 = vset.pattern.permute.xlu0 0
  %402 = vperm.xlu0 %401, %v336
  %v403 = vpop.permute.xlu0 %402
  %404 = vset.pattern.permute.xlu0 0
  %405 = vperm.xlu0 %404, %v337
  %v406 = vpop.permute.xlu0 %405
  %407 = vset.pattern.permute.xlu0 0
  %408 = vperm.xlu0 %407, %v338
  %v409 = vpop.permute.xlu0 %408
  %410 = vset.pattern.permute.xlu0 0
  %411 = vperm.xlu0 %410, %v339
  %v412 = vpop.permute.xlu0 %411
  %413 = vset.pattern.permute.xlu0 0
  %414 = vperm.xlu0 %413, %v340
  %v415 = vpop.permute.xlu0 %414
  %416 = vset.pattern.permute.xlu0 0
  %417 = vperm.xlu0 %416, %v341
  %v418 = vpop.permute.xlu0 %417
  %419 = vset.pattern.permute.xlu0 0
  %420 = vperm.xlu0 %419, %v342
  %v421 = vpop.permute.xlu0 %420
  %422 = vset.pattern.permute.xlu0 0
  %423 = vperm.xlu0 %422, %v343
  %v424 = vpop.permute.xlu0 %423
  %425 = vset.pattern.permute.xlu0 0
  %426 = vperm.xlu0 %425, %v344
  %v427 = vpop.permute.xlu0 %426
  %428 = vset.pattern.permute.xlu0 0
  %429 = vperm.xlu0 %428, %v345
  %v430 = vpop.permute.xlu0 %429
  %431 = vset.pattern.permute.xlu0 0
  %432 = vperm.xlu0 %431, %v346
  %v433 = vpop.permute.xlu0 %432
  %434 = vset.pattern.permute.xlu0 0
  %435 = vperm.xlu0 %434, %v347
  %v436 = vpop.permute.xlu0 %435
  %v437 = vlaneseq
  %v438 = vshrl.u32 %v437, 7
  %v439 = vsub.s32 0, %v438
  %v440 = vrot.slane %v348, %v439
  %vm441 = vcmp.eq.s32.totalorder %v391, %v440
  %vm442 = vcmp.eq.s32.totalorder %v394, %v440
  %vm443 = vcmp.eq.s32.totalorder %v397, %v440
  %vm444 = vcmp.eq.s32.totalorder %v400, %v440
  %vm445 = vcmp.eq.s32.totalorder %v403, %v440
  %vm446 = vcmp.eq.s32.totalorder %v406, %v440
  %vm447 = vcmp.eq.s32.totalorder %v409, %v440
  %vm448 = vcmp.eq.s32.totalorder %v412, %v440
  %vm449 = vcmp.eq.s32.totalorder %v415, %v440
  %vm450 = vcmp.eq.s32.totalorder %v418, %v440
  %vm451 = vcmp.eq.s32.totalorder %v421, %v440
  %vm452 = vcmp.eq.s32.totalorder %v424, %v440
  %vm453 = vcmp.eq.s32.totalorder %v427, %v440
  %vm454 = vcmp.eq.s32.totalorder %v430, %v440
  %vm455 = vcmp.eq.s32.totalorder %v433, %v440
  %vm456 = vcmp.eq.s32.totalorder %v436, %v440
  %vm457 = vcmp.ne.s32.totalorder %v368, %v388
  %vm458 = vcmp.ne.s32.totalorder %v369, %v388
  %vm459 = vcmp.ne.s32.totalorder %v370, %v388
  %vm460 = vcmp.ne.s32.totalorder %v371, %v388
  %vm461 = vcmp.ne.s32.totalorder %v372, %v388
  %vm462 = vcmp.ne.s32.totalorder %v373, %v388
  %vm463 = vcmp.ne.s32.totalorder %v374, %v388
  %vm464 = vcmp.ne.s32.totalorder %v375, %v388
  %vm465 = vcmp.ne.s32.totalorder %v376, %v388
  %vm466 = vcmp.ne.s32.totalorder %v377, %v388
  %vm467 = vcmp.ne.s32.totalorder %v378, %v388
  %vm468 = vcmp.ne.s32.totalorder %v379, %v388
  %vm469 = vcmp.ne.s32.totalorder %v380, %v388
  %vm470 = vcmp.ne.s32.totalorder %v381, %v388
  %vm471 = vcmp.ne.s32.totalorder %v382, %v388
  %vm472 = vcmp.ne.s32.totalorder %v383, %v388
  %vm473 = vmand %vm441, %vm457
  %vm474 = vmand %vm442, %vm458
  %vm475 = vmand %vm443, %vm459
  %vm476 = vmand %vm444, %vm460
  %vm477 = vmand %vm445, %vm461
  %vm478 = vmand %vm446, %vm462
  %vm479 = vmand %vm447, %vm463
  %vm480 = vmand %vm448, %vm464
  %vm481 = vmand %vm449, %vm465
  %vm482 = vmand %vm450, %vm466
  %vm483 = vmand %vm451, %vm467
  %vm484 = vmand %vm452, %vm468
  %vm485 = vmand %vm453, %vm469
  %vm486 = vmand %vm454, %vm470
  %vm487 = vmand %vm455, %vm471
  %vm488 = vmand %vm456, %vm472
  %v489 = vmul.f32 %v316, 1.442695
  %v490 = vpow.pop %v489
  %v491 = vmul.f32 %v317, 1.442695
  %v492 = vpow.pop %v491
  %v493 = vmul.f32 %v318, 1.442695
  %v494 = vpow.pop %v493
  %v495 = vmul.f32 %v319, 1.442695
  %v496 = vpow.pop %v495
  %v497 = vmul.f32 %v320, 1.442695
  %v498 = vpow.pop %v497
  %v499 = vmul.f32 %v321, 1.442695
  %v500 = vpow.pop %v499
  %v501 = vmul.f32 %v322, 1.442695
  %v502 = vpow.pop %v501
  %v503 = vmul.f32 %v323, 1.442695
  %v504 = vpow.pop %v503
  %v505 = vmul.f32 %v324, 1.442695
  %v506 = vpow.pop %v505
  %v507 = vmul.f32 %v325, 1.442695
  %v508 = vpow.pop %v507
  %v509 = vmul.f32 %v326, 1.442695
  %v510 = vpow.pop %v509
  %v511 = vmul.f32 %v327, 1.442695
  %v512 = vpow.pop %v511
  %v513 = vmul.f32 %v328, 1.442695
  %v514 = vpow.pop %v513
  %v515 = vmul.f32 %v329, 1.442695
  %v516 = vpow.pop %v515
  %v517 = vmul.f32 %v330, 1.442695
  %v518 = vpow.pop %v517
  %v519 = vmul.f32 %v331, 1.442695
  %v520 = vpow.pop %v519
  %vm521 = vcmp.lt.s32.totalorder %v388, 8
  %v522 = vsel %vm521, 1, 0
  %vm523 = vcmp.eq.s32.totalorder %v522, 1
  %vm524 = vmand %vm473, %vm523
  %vm525 = vmand %vm474, %vm523
  %vm526 = vmand %vm475, %vm523
  %vm527 = vmand %vm476, %vm523
  %vm528 = vmand %vm477, %vm523
  %vm529 = vmand %vm478, %vm523
  %vm530 = vmand %vm479, %vm523
  %vm531 = vmand %vm480, %vm523
  %vm532 = vmand %vm481, %vm523
  %vm533 = vmand %vm482, %vm523
  %vm534 = vmand %vm483, %vm523
  %vm535 = vmand %vm484, %vm523
  %vm536 = vmand %vm485, %vm523
  %vm537 = vmand %vm486, %vm523
  %vm538 = vmand %vm487, %vm523
  %vm539 = vmand %vm488, %vm523
  %vm540 = vcmp.lt.s32.totalorder %v368, 8
  %vm541 = vcmp.lt.s32.totalorder %v369, 8
  %vm542 = vcmp.lt.s32.totalorder %v370, 8
  %vm543 = vcmp.lt.s32.totalorder %v371, 8
  %vm544 = vcmp.lt.s32.totalorder %v372, 8
  %vm545 = vcmp.lt.s32.totalorder %v373, 8
  %vm546 = vcmp.lt.s32.totalorder %v374, 8
  %vm547 = vcmp.lt.s32.totalorder %v375, 8
  %vm548 = vcmp.lt.s32.totalorder %v376, 8
  %vm549 = vcmp.lt.s32.totalorder %v377, 8
  %vm550 = vcmp.lt.s32.totalorder %v378, 8
  %vm551 = vcmp.lt.s32.totalorder %v379, 8
  %vm552 = vcmp.lt.s32.totalorder %v380, 8
  %vm553 = vcmp.lt.s32.totalorder %v381, 8
  %vm554 = vcmp.lt.s32.totalorder %v382, 8
  %vm555 = vcmp.lt.s32.totalorder %v383, 8
  %v556 = vsel %vm540, 1, 0
  %v557 = vsel %vm541, 1, 0
  %v558 = vsel %vm542, 1, 0
  %v559 = vsel %vm543, 1, 0
  %v560 = vsel %vm544, 1, 0
  %v561 = vsel %vm545, 1, 0
  %v562 = vsel %vm546, 1, 0
  %v563 = vsel %vm547, 1, 0
  %v564 = vsel %vm548, 1, 0
  %v565 = vsel %vm549, 1, 0
  %v566 = vsel %vm550, 1, 0
  %v567 = vsel %vm551, 1, 0
  %v568 = vsel %vm552, 1, 0
  %v569 = vsel %vm553, 1, 0
  %v570 = vsel %vm554, 1, 0
  %v571 = vsel %vm555, 1, 0
  %vm572 = vcmp.eq.s32.totalorder %v556, 1
  %vm573 = vcmp.eq.s32.totalorder %v557, 1
  %vm574 = vcmp.eq.s32.totalorder %v558, 1
  %vm575 = vcmp.eq.s32.totalorder %v559, 1
  %vm576 = vcmp.eq.s32.totalorder %v560, 1
  %vm577 = vcmp.eq.s32.totalorder %v561, 1
  %vm578 = vcmp.eq.s32.totalorder %v562, 1
  %vm579 = vcmp.eq.s32.totalorder %v563, 1
  %vm580 = vcmp.eq.s32.totalorder %v564, 1
  %vm581 = vcmp.eq.s32.totalorder %v565, 1
  %vm582 = vcmp.eq.s32.totalorder %v566, 1
  %vm583 = vcmp.eq.s32.totalorder %v567, 1
  %vm584 = vcmp.eq.s32.totalorder %v568, 1
  %vm585 = vcmp.eq.s32.totalorder %v569, 1
  %vm586 = vcmp.eq.s32.totalorder %v570, 1
  %vm587 = vcmp.eq.s32.totalorder %v571, 1
  %vm588 = vmand %vm524, %vm572
  %vm589 = vmand %vm525, %vm573
  %vm590 = vmand %vm526, %vm574
  %vm591 = vmand %vm527, %vm575
  %vm592 = vmand %vm528, %vm576
  %vm593 = vmand %vm529, %vm577
  %vm594 = vmand %vm530, %vm578
  %vm595 = vmand %vm531, %vm579
  %vm596 = vmand %vm532, %vm580
  %vm597 = vmand %vm533, %vm581
  %vm598 = vmand %vm534, %vm582
  %vm599 = vmand %vm535, %vm583
  %vm600 = vmand %vm536, %vm584
  %vm601 = vmand %vm537, %vm585
  %vm602 = vmand %vm538, %vm586
  %vm603 = vmand %vm539, %vm587
  %v604 = vsel %vm523, %v490, 0.0
  %v605 = vsel %vm523, %v492, 0.0
  %v606 = vsel %vm523, %v494, 0.0
  %v607 = vsel %vm523, %v496, 0.0
  %v608 = vsel %vm523, %v498, 0.0
  %v609 = vsel %vm523, %v500, 0.0
  %v610 = vsel %vm523, %v502, 0.0
  %v611 = vsel %vm523, %v504, 0.0
  %v612 = vsel %vm523, %v506, 0.0
  %v613 = vsel %vm523, %v508, 0.0
  %v614 = vsel %vm523, %v510, 0.0
  %v615 = vsel %vm523, %v512, 0.0
  %v616 = vsel %vm523, %v514, 0.0
  %v617 = vsel %vm523, %v516, 0.0
  %v618 = vsel %vm523, %v518, 0.0
  %v619 = vsel %vm523, %v520, 0.0
  %v620 = vsel %vm588, %v316, 0.0
  %v621 = vsel %vm589, %v317, 0.0
  %v622 = vsel %vm590, %v318, 0.0
  %v623 = vsel %vm591, %v319, 0.0
  %v624 = vsel %vm592, %v320, 0.0
  %v625 = vsel %vm593, %v321, 0.0
  %v626 = vsel %vm594, %v322, 0.0
  %v627 = vsel %vm595, %v323, 0.0
  %v628 = vsel %vm596, %v324, 0.0
  %v629 = vsel %vm597, %v325, 0.0
  %v630 = vsel %vm598, %v326, 0.0
  %v631 = vsel %vm599, %v327, 0.0
  %v632 = vsel %vm600, %v328, 0.0
  %v633 = vsel %vm601, %v329, 0.0
  %v634 = vsel %vm602, %v330, 0.0
  %v635 = vsel %vm603, %v331, 0.0
  %v636 = vld [vmem:[#allocation2] sm:$0xff]
  %v637 = vld [vmem:[#allocation2 + $0x8] sm:$0xff]
  %v638 = vld [vmem:[#allocation2 + $0x10] sm:$0xff]
  %v639 = vld [vmem:[#allocation2 + $0x18] sm:$0xff]
  %v640 = vld [vmem:[#allocation2 + $0x20] sm:$0xff]
  %v641 = vld [vmem:[#allocation2 + $0x28] sm:$0xff]
  %v642 = vld [vmem:[#allocation2 + $0x30] sm:$0xff]
  %v643 = vld [vmem:[#allocation2 + $0x38] sm:$0xff]
  %v644 = vld [vmem:[#allocation2 + $0x40] sm:$0xff]
  %v645 = vld [vmem:[#allocation2 + $0x48] sm:$0xff]
  %v646 = vld [vmem:[#allocation2 + $0x50] sm:$0xff]
  %v647 = vld [vmem:[#allocation2 + $0x58] sm:$0xff]
  %v648 = vld [vmem:[#allocation2 + $0x60] sm:$0xff]
  %v649 = vld [vmem:[#allocation2 + $0x68] sm:$0xff]
  %v650 = vld [vmem:[#allocation2 + $0x70] sm:$0xff]
  %v651 = vld [vmem:[#allocation2 + $0x78] sm:$0xff]
  %v652 = vld [vmem:[#allocation3] sm:$0xff]
  %v653 = vld [vmem:[#allocation3 + $0x8] sm:$0xff]
  %v654 = vld [vmem:[#allocation3 + $0x10] sm:$0xff]
  %v655 = vld [vmem:[#allocation3 + $0x18] sm:$0xff]
  %v656 = vld [vmem:[#allocation3 + $0x20] sm:$0xff]
  %v657 = vld [vmem:[#allocation3 + $0x28] sm:$0xff]
  %v658 = vld [vmem:[#allocation3 + $0x30] sm:$0xff]
  %v659 = vld [vmem:[#allocation3 + $0x38] sm:$0xff]
  %v660 = vld [vmem:[#allocation3 + $0x40] sm:$0xff]
  %v661 = vld [vmem:[#allocation3 + $0x48] sm:$0xff]
  %v662 = vld [vmem:[#allocation3 + $0x50] sm:$0xff]
  %v663 = vld [vmem:[#allocation3 + $0x58] sm:$0xff]
  %v664 = vld [vmem:[#allocation3 + $0x60] sm:$0xff]
  %v665 = vld [vmem:[#allocation3 + $0x68] sm:$0xff]
  %v666 = vld [vmem:[#allocation3 + $0x70] sm:$0xff]
  %v667 = vld [vmem:[#allocation3 + $0x78] sm:$0xff]
  %v668 = vadd.f32 %v636, %v604
  %v669 = vadd.f32 %v637, %v605
  %v670 = vadd.f32 %v638, %v606
  %v671 = vadd.f32 %v639, %v607
  %v672 = vadd.f32 %v640, %v608
  %v673 = vadd.f32 %v641, %v609
  %v674 = vadd.f32 %v642, %v610
  %v675 = vadd.f32 %v643, %v611
  %v676 = vadd.f32 %v644, %v612
  %v677 = vadd.f32 %v645, %v613
  %v678 = vadd.f32 %v646, %v614
  %v679 = vadd.f32 %v647, %v615
  %v680 = vadd.f32 %v648, %v616
  %v681 = vadd.f32 %v649, %v617
  %v682 = vadd.f32 %v650, %v618
  %v683 = vadd.f32 %v651, %v619
  %v684 = vadd.f32 %v652, %v620
  %v685 = vadd.f32 %v653, %v621
  %v686 = vadd.f32 %v654, %v622
  %v687 = vadd.f32 %v655, %v623
  %v688 = vadd.f32 %v656, %v624
  %v689 = vadd.f32 %v657, %v625
  %v690 = vadd.f32 %v658, %v626
  %v691 = vadd.f32 %v659, %v627
  %v692 = vadd.f32 %v660, %v628
  %v693 = vadd.f32 %v661, %v629
  %v694 = vadd.f32 %v662, %v630
  %v695 = vadd.f32 %v663, %v631
  %v696 = vadd.f32 %v664, %v632
  %v697 = vadd.f32 %v665, %v633
  %v698 = vadd.f32 %v666, %v634
  %v699 = vadd.f32 %v667, %v635
  %700 = vst [vmem:[#allocation2] sm:$0xff] %v668
  %701 = vst [vmem:[#allocation2 + $0x8] sm:$0xff] %v669
  %702 = vst [vmem:[#allocation2 + $0x10] sm:$0xff] %v670
  %703 = vst [vmem:[#allocation2 + $0x18] sm:$0xff] %v671
  %704 = vst [vmem:[#allocation2 + $0x20] sm:$0xff] %v672
  %705 = vst [vmem:[#allocation2 + $0x28] sm:$0xff] %v673
  %706 = vst [vmem:[#allocation2 + $0x30] sm:$0xff] %v674
  %707 = vst [vmem:[#allocation2 + $0x38] sm:$0xff] %v675
  %708 = vst [vmem:[#allocation2 + $0x40] sm:$0xff] %v676
  %709 = vst [vmem:[#allocation2 + $0x48] sm:$0xff] %v677
  %710 = vst [vmem:[#allocation2 + $0x50] sm:$0xff] %v678
  %711 = vst [vmem:[#allocation2 + $0x58] sm:$0xff] %v679
  %712 = vst [vmem:[#allocation2 + $0x60] sm:$0xff] %v680
  %713 = vst [vmem:[#allocation2 + $0x68] sm:$0xff] %v681
  %714 = vst [vmem:[#allocation2 + $0x70] sm:$0xff] %v682
  %715 = vst [vmem:[#allocation2 + $0x78] sm:$0xff] %v683
  %716 = vst [vmem:[#allocation3] sm:$0xff] %v684
  %717 = vst [vmem:[#allocation3 + $0x8] sm:$0xff] %v685
  %718 = vst [vmem:[#allocation3 + $0x10] sm:$0xff] %v686
  %719 = vst [vmem:[#allocation3 + $0x18] sm:$0xff] %v687
  %720 = vst [vmem:[#allocation3 + $0x20] sm:$0xff] %v688
  %721 = vst [vmem:[#allocation3 + $0x28] sm:$0xff] %v689
  %722 = vst [vmem:[#allocation3 + $0x30] sm:$0xff] %v690
  %723 = vst [vmem:[#allocation3 + $0x38] sm:$0xff] %v691
  %724 = vst [vmem:[#allocation3 + $0x40] sm:$0xff] %v692
  %725 = vst [vmem:[#allocation3 + $0x48] sm:$0xff] %v693
  %726 = vst [vmem:[#allocation3 + $0x50] sm:$0xff] %v694
  %727 = vst [vmem:[#allocation3 + $0x58] sm:$0xff] %v695
  %728 = vst [vmem:[#allocation3 + $0x60] sm:$0xff] %v696
  %729 = vst [vmem:[#allocation3 + $0x68] sm:$0xff] %v697
  %730 = vst [vmem:[#allocation3 + $0x70] sm:$0xff] %v698
  %731 = vst [vmem:[#allocation3 + $0x78] sm:$0xff] %v699
  // Predicated region
  $region22: #{tpu_custom_call.1} parent=0 // pred_check
    _
  $region23: #{tpu_custom_call.1} parent=0 // pred_check_branch
    %733 = sbr.rel (%p22) target = $region25
  $region24: #{tpu_custom_call.1} parent=0 // pred_region
    %v734 = vld [vmem:[#allocation2] sm:$0xff]
    %v735 = vld [vmem:[#allocation2 + $0x8] sm:$0xff]
    %v736 = vld [vmem:[#allocation2 + $0x10] sm:$0xff]
    %v737 = vld [vmem:[#allocation2 + $0x18] sm:$0xff]
    %v738 = vld [vmem:[#allocation2 + $0x20] sm:$0xff]
    %v739 = vld [vmem:[#allocation2 + $0x28] sm:$0xff]
    %v740 = vld [vmem:[#allocation2 + $0x30] sm:$0xff]
    %v741 = vld [vmem:[#allocation2 + $0x38] sm:$0xff]
    %v742 = vld [vmem:[#allocation2 + $0x40] sm:$0xff]
    %v743 = vld [vmem:[#allocation2 + $0x48] sm:$0xff]
    %v744 = vld [vmem:[#allocation2 + $0x50] sm:$0xff]
    %v745 = vld [vmem:[#allocation2 + $0x58] sm:$0xff]
    %v746 = vld [vmem:[#allocation2 + $0x60] sm:$0xff]
    %v747 = vld [vmem:[#allocation2 + $0x68] sm:$0xff]
    %v748 = vld [vmem:[#allocation2 + $0x70] sm:$0xff]
    %v749 = vld [vmem:[#allocation2 + $0x78] sm:$0xff]
    %750 = vadd.xlane.f32.xlu0 %v734
    %v751 = vpop.xlane.xlu0 %750
    %752 = vadd.xlane.f32.xlu0 %v735
    %v753 = vpop.xlane.xlu0 %752
    %754 = vadd.xlane.f32.xlu0 %v736
    %v755 = vpop.xlane.xlu0 %754
    %756 = vadd.xlane.f32.xlu0 %v737
    %v757 = vpop.xlane.xlu0 %756
    %758 = vadd.xlane.f32.xlu0 %v738
    %v759 = vpop.xlane.xlu0 %758
    %760 = vadd.xlane.f32.xlu0 %v739
    %v761 = vpop.xlane.xlu0 %760
    %762 = vadd.xlane.f32.xlu0 %v740
    %v763 = vpop.xlane.xlu0 %762
    %764 = vadd.xlane.f32.xlu0 %v741
    %v765 = vpop.xlane.xlu0 %764
    %766 = vadd.xlane.f32.xlu0 %v742
    %v767 = vpop.xlane.xlu0 %766
    %768 = vadd.xlane.f32.xlu0 %v743
    %v769 = vpop.xlane.xlu0 %768
    %770 = vadd.xlane.f32.xlu0 %v744
    %v771 = vpop.xlane.xlu0 %770
    %772 = vadd.xlane.f32.xlu0 %v745
    %v773 = vpop.xlane.xlu0 %772
    %774 = vadd.xlane.f32.xlu0 %v746
    %v775 = vpop.xlane.xlu0 %774
    %776 = vadd.xlane.f32.xlu0 %v747
    %v777 = vpop.xlane.xlu0 %776
    %778 = vadd.xlane.f32.xlu0 %v748
    %v779 = vpop.xlane.xlu0 %778
    %780 = vadd.xlane.f32.xlu0 %v749
    %v781 = vpop.xlane.xlu0 %780
    %v782 = vadd.f32 %v751, 1e-06
    %v783 = vadd.f32 %v753, 1e-06
    %v784 = vadd.f32 %v755, 1e-06
    %v785 = vadd.f32 %v757, 1e-06
    %v786 = vadd.f32 %v759, 1e-06
    %v787 = vadd.f32 %v761, 1e-06
    %v788 = vadd.f32 %v763, 1e-06
    %v789 = vadd.f32 %v765, 1e-06
    %v790 = vadd.f32 %v767, 1e-06
    %v791 = vadd.f32 %v769, 1e-06
    %v792 = vadd.f32 %v771, 1e-06
    %v793 = vadd.f32 %v773, 1e-06
    %v794 = vadd.f32 %v775, 1e-06
    %v795 = vadd.f32 %v777, 1e-06
    %v796 = vadd.f32 %v779, 1e-06
    %v797 = vadd.f32 %v781, 1e-06
    %v798 = vlog2.pop %v782
    %v799 = vmul.f32 %v798, 0.6931472
    %v800 = vlog2.pop %v783
    %v801 = vmul.f32 %v800, 0.6931472
    %v802 = vlog2.pop %v784
    %v803 = vmul.f32 %v802, 0.6931472
    %v804 = vlog2.pop %v785
    %v805 = vmul.f32 %v804, 0.6931472
    %v806 = vlog2.pop %v786
    %v807 = vmul.f32 %v806, 0.6931472
    %v808 = vlog2.pop %v787
    %v809 = vmul.f32 %v808, 0.6931472
    %v810 = vlog2.pop %v788
    %v811 = vmul.f32 %v810, 0.6931472
    %v812 = vlog2.pop %v789
    %v813 = vmul.f32 %v812, 0.6931472
    %v814 = vlog2.pop %v790
    %v815 = vmul.f32 %v814, 0.6931472
    %v816 = vlog2.pop %v791
    %v817 = vmul.f32 %v816, 0.6931472
    %v818 = vlog2.pop %v792
    %v819 = vmul.f32 %v818, 0.6931472
    %v820 = vlog2.pop %v793
    %v821 = vmul.f32 %v820, 0.6931472
    %v822 = vlog2.pop %v794
    %v823 = vmul.f32 %v822, 0.6931472
    %v824 = vlog2.pop %v795
    %v825 = vmul.f32 %v824, 0.6931472
    %v826 = vlog2.pop %v796
    %v827 = vmul.f32 %v826, 0.6931472
    %v828 = vlog2.pop %v797
    %v829 = vmul.f32 %v828, 0.6931472
    %vm830 = vcmask 7168
    %831 = vst.msk [vmem:[%s5] sm:$0xff] %vm830, %v799
    %832 = vst.msk [vmem:[%s5 + $0x8] sm:$0xff] %vm830, %v801
    %833 = vst.msk [vmem:[%s5 + $0x10] sm:$0xff] %vm830, %v803
    %834 = vst.msk [vmem:[%s5 + $0x18] sm:$0xff] %vm830, %v805
    %835 = vst.msk [vmem:[%s5 + $0x20] sm:$0xff] %vm830, %v807
    %836 = vst.msk [vmem:[%s5 + $0x28] sm:$0xff] %vm830, %v809
    %837 = vst.msk [vmem:[%s5 + $0x30] sm:$0xff] %vm830, %v811
    %838 = vst.msk [vmem:[%s5 + $0x38] sm:$0xff] %vm830, %v813
    %839 = vst.msk [vmem:[%s5 + $0x40] sm:$0xff] %vm830, %v815
    %840 = vst.msk [vmem:[%s5 + $0x48] sm:$0xff] %vm830, %v817
    %841 = vst.msk [vmem:[%s5 + $0x50] sm:$0xff] %vm830, %v819
    %842 = vst.msk [vmem:[%s5 + $0x58] sm:$0xff] %vm830, %v821
    %843 = vst.msk [vmem:[%s5 + $0x60] sm:$0xff] %vm830, %v823
    %844 = vst.msk [vmem:[%s5 + $0x68] sm:$0xff] %vm830, %v825
    %845 = vst.msk [vmem:[%s5 + $0x70] sm:$0xff] %vm830, %v827
    %846 = vst.msk [vmem:[%s5 + $0x78] sm:$0xff] %vm830, %v829
    %v847 = vld [vmem:[#allocation3] sm:$0xff]
    %v848 = vld [vmem:[#allocation3 + $0x8] sm:$0xff]
    %v849 = vld [vmem:[#allocation3 + $0x10] sm:$0xff]
    %v850 = vld [vmem:[#allocation3 + $0x18] sm:$0xff]
    %v851 = vld [vmem:[#allocation3 + $0x20] sm:$0xff]
    %v852 = vld [vmem:[#allocation3 + $0x28] sm:$0xff]
    %v853 = vld [vmem:[#allocation3 + $0x30] sm:$0xff]
    %v854 = vld [vmem:[#allocation3 + $0x38] sm:$0xff]
    %v855 = vld [vmem:[#allocation3 + $0x40] sm:$0xff]
    %v856 = vld [vmem:[#allocation3 + $0x48] sm:$0xff]
    %v857 = vld [vmem:[#allocation3 + $0x50] sm:$0xff]
    %v858 = vld [vmem:[#allocation3 + $0x58] sm:$0xff]
    %v859 = vld [vmem:[#allocation3 + $0x60] sm:$0xff]
    %v860 = vld [vmem:[#allocation3 + $0x68] sm:$0xff]
    %v861 = vld [vmem:[#allocation3 + $0x70] sm:$0xff]
    %v862 = vld [vmem:[#allocation3 + $0x78] sm:$0xff]
    %863 = vadd.xlane.f32.xlu0 %v847
    %v864 = vpop.xlane.xlu0 %863
    %865 = vadd.xlane.f32.xlu0 %v848
    %v866 = vpop.xlane.xlu0 %865
    %867 = vadd.xlane.f32.xlu0 %v849
    %v868 = vpop.xlane.xlu0 %867
    %869 = vadd.xlane.f32.xlu0 %v850
    %v870 = vpop.xlane.xlu0 %869
    %871 = vadd.xlane.f32.xlu0 %v851
    %v872 = vpop.xlane.xlu0 %871
    %873 = vadd.xlane.f32.xlu0 %v852
    %v874 = vpop.xlane.xlu0 %873
    %875 = vadd.xlane.f32.xlu0 %v853
    %v876 = vpop.xlane.xlu0 %875
    %877 = vadd.xlane.f32.xlu0 %v854
    %v878 = vpop.xlane.xlu0 %877
    %879 = vadd.xlane.f32.xlu0 %v855
    %v880 = vpop.xlane.xlu0 %879
    %881 = vadd.xlane.f32.xlu0 %v856
    %v882 = vpop.xlane.xlu0 %881
    %883 = vadd.xlane.f32.xlu0 %v857
    %v884 = vpop.xlane.xlu0 %883
    %885 = vadd.xlane.f32.xlu0 %v858
    %v886 = vpop.xlane.xlu0 %885
    %887 = vadd.xlane.f32.xlu0 %v859
    %v888 = vpop.xlane.xlu0 %887
    %889 = vadd.xlane.f32.xlu0 %v860
    %v890 = vpop.xlane.xlu0 %889
    %891 = vadd.xlane.f32.xlu0 %v861
    %v892 = vpop.xlane.xlu0 %891
    %893 = vadd.xlane.f32.xlu0 %v862
    %v894 = vpop.xlane.xlu0 %893
    %895 = vst.msk [vmem:[%s4] sm:$0xff] %vm830, %v864
    %896 = vst.msk [vmem:[%s4 + $0x8] sm:$0xff] %vm830, %v866
    %897 = vst.msk [vmem:[%s4 + $0x10] sm:$0xff] %vm830, %v868
    %898 = vst.msk [vmem:[%s4 + $0x18] sm:$0xff] %vm830, %v870
    %899 = vst.msk [vmem:[%s4 + $0x20] sm:$0xff] %vm830, %v872
    %900 = vst.msk [vmem:[%s4 + $0x28] sm:$0xff] %vm830, %v874
    %901 = vst.msk [vmem:[%s4 + $0x30] sm:$0xff] %vm830, %v876
    %902 = vst.msk [vmem:[%s4 + $0x38] sm:$0xff] %vm830, %v878
    %903 = vst.msk [vmem:[%s4 + $0x40] sm:$0xff] %vm830, %v880
    %904 = vst.msk [vmem:[%s4 + $0x48] sm:$0xff] %vm830, %v882
    %905 = vst.msk [vmem:[%s4 + $0x50] sm:$0xff] %vm830, %v884
    %906 = vst.msk [vmem:[%s4 + $0x58] sm:$0xff] %vm830, %v886
    %907 = vst.msk [vmem:[%s4 + $0x60] sm:$0xff] %vm830, %v888
    %908 = vst.msk [vmem:[%s4 + $0x68] sm:$0xff] %vm830, %v890
    %909 = vst.msk [vmem:[%s4 + $0x70] sm:$0xff] %vm830, %v892
    %910 = vst.msk [vmem:[%s4 + $0x78] sm:$0xff] %vm830, %v894
  $region25: #{tpu_custom_call.1} parent=0 // pred_fallthru
    _
  // Predicated region
  $region26: #{tpu_custom_call.1} parent=0 // pred_check
    _
  $region27: #{tpu_custom_call.1} parent=0 // pred_check_branch
    %912 = sbr.rel (0) target = $region29
  $region28: #{tpu_custom_call.1} parent=0 // pred_region
    _
  $region29: #{tpu_custom_call.1} parent=0 // pred_fallthru
    _
  // Predicated region
  $region30: #{tpu_custom_call.1} parent=0 // pred_check
    _
  $region31: #{tpu_custom_call.1} parent=0 // pred_check_branch
    %914 = sbr.rel (0) target = $region33
  $region32: #{tpu_custom_call.1} parent=0 // pred_region
    _
  $region33: #{tpu_custom_call.1} parent=0 // pred_fallthru
    _
  // Predicated region
  $region34: #{tpu_custom_call.1} parent=0 // pred_check
    _
  $region35: #{tpu_custom_call.1} parent=0 // pred_check_branch
    %916 = sbr.rel (0) target = $region37
  $region36: #{tpu_custom_call.1} parent=0 // pred_region
    _
  $region37: #{tpu_custom_call.1} parent=0 // pred_fallthru
    _
  // Predicated region
  $region38: #{tpu_custom_call.1} parent=0 // pred_check
    _
  $region39: #{tpu_custom_call.1} parent=0 // pred_check_branch
    %918 = sbr.rel (0) target = $region41
  $region40: #{tpu_custom_call.1} parent=0 // pred_region
    _
  $region41: #{tpu_custom_call.1} parent=0 // pred_fallthru
    _

</llo_original>
